<compile_context>
chip_gen: v7x
topology: tpu7x:2x2x1
jax: 0.10.0
libtpu: 0.0.40
codegen_flags: <defaults>
</compile_context>

<pallas_src>
import functools

import jax
import jax.numpy as jnp
from jax.experimental import pallas as pl
from jax.experimental.pallas import tpu as pltpu

QDIM = 3
SPD_DIAG_BIAS = 1e-7
INIT_PARAM_STD = 0.01


# ----------------------------------------------------------------------------
# Single-sample path: SMEM in, SMEM out, pure scalar-unit math.
# ----------------------------------------------------------------------------
def _inertia_kernel_scalar(l_ref, out_ref):
    """Closed-form inertia assembly on the scalar unit.

    l_ref   : SMEM (6,) f32 -- [L00, L11, L22, L10, L20, L21]
    out_ref : SMEM (9,) f32 -- inertia matrix, row-major (reshaped to (3,3) outside)
    """
    l0 = l_ref[0]  # L[0, 0]
    l1 = l_ref[1]  # L[1, 1]
    l2 = l_ref[2]  # L[2, 2]
    l3 = l_ref[3]  # L[1, 0]
    l4 = l_ref[4]  # L[2, 0]
    l5 = l_ref[5]  # L[2, 1]

    # SPSD = L @ L^T expanded for lower-triangular 3x3 L.
    s00 = l0 * l0
    s11 = l3 * l3 + l1 * l1
    s22 = l4 * l4 + l5 * l5 + l2 * l2
    s10 = l0 * l3
    s20 = l0 * l4
    s21 = l3 * l4 + l1 * l5

    # spd = SPSD + bias * I3 ;  inertia = trace(spd) * I3 - spd.
    # Each diagonal inertia entry sums two spd diagonal terms -> +2*bias;
    # off-diagonal entries carry no bias.
    two_bias = jnp.float32(2.0 * SPD_DIAG_BIAS)
    out_ref[0] = s11 + s22 + two_bias   # [0,0]
    out_ref[1] = -s10                   # [0,1]
    out_ref[2] = -s20                   # [0,2]
    out_ref[3] = -s10                   # [1,0]
    out_ref[4] = s00 + s22 + two_bias   # [1,1]
    out_ref[5] = -s21                   # [1,2]
    out_ref[6] = -s20                   # [2,0]
    out_ref[7] = -s21                   # [2,1]
    out_ref[8] = s00 + s11 + two_bias   # [2,2]


@jax.jit
def cov_parameterized_3d_inertia_matrix_forward(l_vec):
    """Equivalent of CovParameterized3DInertiaMatrixNet.forward(); returns (3, 3) f32."""
    flat = pl.pallas_call(
        _inertia_kernel_scalar,
        out_shape=jax.ShapeDtypeStruct((QDIM * QDIM,), jnp.float32),
        in_specs=[pl.BlockSpec(memory_space=pltpu.MemorySpace.SMEM)],
        out_specs=pl.BlockSpec(memory_space=pltpu.MemorySpace.SMEM),
        cost_estimate=pl.CostEstimate(
            flops=15, transcendentals=0, bytes_accessed=(6 + 9) * 4
        ),
    )(l_vec.astype(jnp.float32))
    return flat.reshape(QDIM, QDIM)


# ----------------------------------------------------------------------------
# Lane-batched path: (6, B) params -> (9, B) inertia entries, VPU in lockstep.
# Keeps f32 throughout (v5e VPU has no bf16).  Grid over B-chunks is "parallel"
# so both v7x TensorCores take half the bodies.
# ----------------------------------------------------------------------------
def _inertia_kernel_batched(l_ref, out_ref):
    """l_ref: VMEM (6, tb) f32;  out_ref: VMEM (9, tb) f32, rows in row-major order."""
    l = l_ref[...]                      # (6, tb)
    l0 = l[0:1, :]
    l1 = l[1:2, :]
    l2 = l[2:3, :]
    l3 = l[3:4, :]
    l4 = l[4:5, :]
    l5 = l[5:6, :]

    s00 = l0 * l0
    s11 = l3 * l3 + l1 * l1
    s22 = l4 * l4 + l5 * l5 + l2 * l2
    s10 = l0 * l3
    s20 = l0 * l4
    s21 = l3 * l4 + l1 * l5

    two_bias = jnp.float32(2.0 * SPD_DIAG_BIAS)
    out_ref[0:1, :] = s11 + s22 + two_bias   # [0,0]
    out_ref[1:2, :] = -s10                   # [0,1]
    out_ref[2:3, :] = -s20                   # [0,2]
    out_ref[3:4, :] = -s10                   # [1,0]
    out_ref[4:5, :] = s00 + s22 + two_bias   # [1,1]
    out_ref[5:6, :] = -s21                   # [1,2]
    out_ref[6:7, :] = -s20                   # [2,0]
    out_ref[7:8, :] = -s21                   # [2,1]
    out_ref[8:9, :] = s00 + s11 + two_bias   # [2,2]


@functools.partial(jax.jit, static_argnames=("tb",))
def cov_parameterized_3d_inertia_matrix_forward_batched(l_mat, *, tb=128):
    """Batched forward: l_mat shape (6, B) -> (B, 3, 3) f32 inertia matrices."""
    l_mat = l_mat.astype(jnp.float32)
    six, b = l_mat.shape
    assert six == 6
    b_pad = ((b + tb - 1) // tb) * tb
    if b_pad != b:
        l_mat = jnp.pad(l_mat, ((0, 0), (0, b_pad - b)))

    out = pl.pallas_call(
        _inertia_kernel_batched,
        out_shape=jax.ShapeDtypeStruct((QDIM * QDIM, b_pad), jnp.float32),
        grid=(b_pad // tb,),
        in_specs=[pl.BlockSpec((6, tb), lambda i: (0, i))],
        out_specs=pl.BlockSpec((QDIM * QDIM, tb), lambda i: (0, i)),
        compiler_params=pltpu.CompilerParams(dimension_semantics=("parallel",)),
        cost_estimate=pl.CostEstimate(
            flops=15 * b_pad, transcendentals=0, bytes_accessed=(6 + 9) * 4 * b_pad
        ),
    )(l_mat)

    out = out[:, :b]                               # (9, B)
    return jnp.transpose(out.reshape(QDIM, QDIM, b), (2, 0, 1))   # (B, 3, 3)


# ----------------------------------------------------------------------------
# Pure-JAX reference mirroring the PyTorch code line-by-line (for checking).
# ----------------------------------------------------------------------------
def _reference_forward(l_vec):
    l_vec = l_vec.astype(jnp.float32)
    rows = jnp.array([0, 1, 2, 1, 2, 2], dtype=jnp.int32)
    cols = jnp.array([0, 1, 2, 0, 0, 1], dtype=jnp.int32)
    L = jnp.zeros((QDIM, QDIM), dtype=jnp.float32).at[rows, cols].set(l_vec)
    spsd = L @ L.T
    spd = spsd + SPD_DIAG_BIAS * jnp.eye(QDIM, dtype=jnp.float32)
    inertia = jnp.zeros((QDIM, QDIM), dtype=jnp.float32)
    inertia = inertia.at[0, 0].set(spd[1, 1] + spd[2, 2])
    inertia = inertia.at[1, 1].set(spd[0, 0] + spd[2, 2])
    inertia = inertia.at[2, 2].set(spd[0, 0] + spd[1, 1])
    inertia = inertia.at[1, 0].set(-spd[1, 0])
    inertia = inertia.at[2, 0].set(-spd[2, 0])
    inertia = inertia.at[2, 1].set(-spd[2, 1])
    inertia = inertia.at[0, 1].set(inertia[1, 0])
    inertia = inertia.at[0, 2].set(inertia[2, 0])
    inertia = inertia.at[1, 2].set(inertia[2, 1])
    return inertia


if __name__ == "__main__":
    key = jax.random.PRNGKey(0)
    k_single, k_batch = jax.random.split(key)

    # Single body (matches torch.empty(1, 6).normal_(0.0, 0.01).squeeze()).
    l_param = INIT_PARAM_STD * jax.random.normal(k_single, (6,), dtype=jnp.float32)
    inertia = jax.block_until_ready(cov_parameterized_3d_inertia_matrix_forward(l_param))
    ref = _reference_forward(l_param)
    assert inertia.shape == (3, 3) and inertia.dtype == jnp.float32
    assert jnp.allclose(inertia, ref, atol=1e-6, rtol=1e-5), (inertia, ref)

    # Lane-batched variant: many bodies per step (B not a multiple of 128 to
    # exercise the padding path).
    B = 200
    l_batch = INIT_PARAM_STD * jax.random.normal(k_batch, (6, B), dtype=jnp.float32)
    inertia_b = jax.block_until_ready(
        cov_parameterized_3d_inertia_matrix_forward_batched(l_batch)
    )
    ref_b = jax.vmap(_reference_forward, in_axes=1, out_axes=0)(l_batch)
    assert inertia_b.shape == (B, 3, 3) and inertia_b.dtype == jnp.float32
    assert jnp.allclose(inertia_b, ref_b, atol=1e-6, rtol=1e-5)

    print("KERNEL_OK")
</pallas_src>

<mosaic_0001>
module attributes {stable_mosaic.version = 11 : i64} {
  func.func @_inertia_kernel_scalar(%arg0: memref<6xf32, #tpu.memory_space<smem>>, %arg1: memref<9xf32, #tpu.memory_space<smem>>) attributes {dimension_semantics = [], scalar_prefetch = 0 : i64, scratch_operands = 0 : i64, tpu.core_type = #tpu.core_type<tc>} {
    %c0 = arith.constant 0 : index
    %0 = memref.load %arg0[%c0] : memref<6xf32, #tpu.memory_space<smem>>
    %c1 = arith.constant 1 : index
    %1 = memref.load %arg0[%c1] : memref<6xf32, #tpu.memory_space<smem>>
    %c2 = arith.constant 2 : index
    %2 = memref.load %arg0[%c2] : memref<6xf32, #tpu.memory_space<smem>>
    %c3 = arith.constant 3 : index
    %3 = memref.load %arg0[%c3] : memref<6xf32, #tpu.memory_space<smem>>
    %c4 = arith.constant 4 : index
    %4 = memref.load %arg0[%c4] : memref<6xf32, #tpu.memory_space<smem>>
    %c5 = arith.constant 5 : index
    %5 = memref.load %arg0[%c5] : memref<6xf32, #tpu.memory_space<smem>>
    %6 = arith.mulf %0, %0 : f32
    %7 = arith.mulf %3, %3 : f32
    %8 = arith.mulf %1, %1 : f32
    %9 = arith.addf %7, %8 : f32
    %10 = arith.mulf %4, %4 : f32
    %11 = arith.mulf %5, %5 : f32
    %12 = arith.addf %10, %11 : f32
    %13 = arith.mulf %2, %2 : f32
    %14 = arith.addf %12, %13 : f32
    %15 = arith.mulf %0, %3 : f32
    %16 = arith.mulf %0, %4 : f32
    %17 = arith.mulf %3, %4 : f32
    %18 = arith.mulf %1, %5 : f32
    %19 = arith.addf %17, %18 : f32
    %20 = arith.addf %9, %14 : f32
    %cst = arith.constant 2.000000e-07 : f32
    %21 = arith.addf %20, %cst : f32
    %c0_0 = arith.constant 0 : index
    %22 = memref.load %arg1[%c0_0] : memref<9xf32, #tpu.memory_space<smem>>
    memref.store %21, %arg1[%c0_0] : memref<9xf32, #tpu.memory_space<smem>>
    %cst_1 = arith.constant 0.000000e+00 : f32
    %23 = arith.subf %cst_1, %15 : f32
    %c1_2 = arith.constant 1 : index
    %24 = memref.load %arg1[%c1_2] : memref<9xf32, #tpu.memory_space<smem>>
    memref.store %23, %arg1[%c1_2] : memref<9xf32, #tpu.memory_space<smem>>
    %cst_3 = arith.constant 0.000000e+00 : f32
    %25 = arith.subf %cst_3, %16 : f32
    %c2_4 = arith.constant 2 : index
    %26 = memref.load %arg1[%c2_4] : memref<9xf32, #tpu.memory_space<smem>>
    memref.store %25, %arg1[%c2_4] : memref<9xf32, #tpu.memory_space<smem>>
    %cst_5 = arith.constant 0.000000e+00 : f32
    %27 = arith.subf %cst_5, %15 : f32
    %c3_6 = arith.constant 3 : index
    %28 = memref.load %arg1[%c3_6] : memref<9xf32, #tpu.memory_space<smem>>
    memref.store %27, %arg1[%c3_6] : memref<9xf32, #tpu.memory_space<smem>>
    %29 = arith.addf %6, %14 : f32
    %cst_7 = arith.constant 2.000000e-07 : f32
    %30 = arith.addf %29, %cst_7 : f32
    %c4_8 = arith.constant 4 : index
    %31 = memref.load %arg1[%c4_8] : memref<9xf32, #tpu.memory_space<smem>>
    memref.store %30, %arg1[%c4_8] : memref<9xf32, #tpu.memory_space<smem>>
    %cst_9 = arith.constant 0.000000e+00 : f32
    %32 = arith.subf %cst_9, %19 : f32
    %c5_10 = arith.constant 5 : index
    %33 = memref.load %arg1[%c5_10] : memref<9xf32, #tpu.memory_space<smem>>
    memref.store %32, %arg1[%c5_10] : memref<9xf32, #tpu.memory_space<smem>>
    %cst_11 = arith.constant 0.000000e+00 : f32
    %34 = arith.subf %cst_11, %16 : f32
    %c6 = arith.constant 6 : index
    %35 = memref.load %arg1[%c6] : memref<9xf32, #tpu.memory_space<smem>>
    memref.store %34, %arg1[%c6] : memref<9xf32, #tpu.memory_space<smem>>
    %cst_12 = arith.constant 0.000000e+00 : f32
    %36 = arith.subf %cst_12, %19 : f32
    %c7 = arith.constant 7 : index
    %37 = memref.load %arg1[%c7] : memref<9xf32, #tpu.memory_space<smem>>
    memref.store %36, %arg1[%c7] : memref<9xf32, #tpu.memory_space<smem>>
    %38 = arith.addf %6, %9 : f32
    %cst_13 = arith.constant 2.000000e-07 : f32
    %39 = arith.addf %38, %cst_13 : f32
    %c8 = arith.constant 8 : index
    %40 = memref.load %arg1[%c8] : memref<9xf32, #tpu.memory_space<smem>>
    memref.store %39, %arg1[%c8] : memref<9xf32, #tpu.memory_space<smem>>
    return
  }
}

</mosaic_0001>

<llo_original>
// kernel: cov_parameterized_3d_inertia_matrix_forward.1
$region0: #{cov_parameterized_3d_inertia_matrix_forward.1}
  #allocation0 [shape = 'u32[]', space=smem, size = 0x4, offset = 0x4, fixed_abs, tag = 'smem constant byte address 0x4 - core index']
  #allocation1 [shape = 'u32[144,128]{1,0:T(1,128)}', space=vmem, size = 0x12000, scoped, tag = 'internal scratch']
  %s0 = inlined_call_operand.hbm [shape: f32[6], index: 0, kind: input, shape index: {}]
  %s1 = inlined_call_operand.vmem [shape: f32[9], index: 1, kind: output, shape index: {}]
  %s2 = sld [smem:[#allocation0]]
  $region18: #{cov_parameterized_3d_inertia_matrix_forward.1} parent=0
    _
  %s4 = ssub.s32 1, %s2
  %s5 = scalar_select 0, %s4, %s2
  $region1: #{cov_parameterized_3d_inertia_matrix_forward.1} parent=0
    #allocation2 [shape = 'u8[512]{0}', space=smem, size = 0x200, scoped, tag = 'input window, operand 0, single buffered']
    #allocation3 [shape = 's32[1]{0}', space=sflag, size = 0x4, scoped, tag = 'scoped memory for cov_parameterized_3d_inertia_matrix_forward.1']
    #allocation4 [shape = 's32[1]{0}', space=sflag, size = 0x4, scoped, tag = 'scoped memory for cov_parameterized_3d_inertia_matrix_forward.1']
    #allocation5 [shape = 'u8[512]{0}', space=smem, size = 0x200, scoped, tag = 'output window, operand 0, single buffered']
    %6 = vsyncpa [#allocation3], 0
    %7 = vsyncpa [#allocation4], 0
    // Predicated region
    $region2: #{cov_parameterized_3d_inertia_matrix_forward.1} parent=1 // pred_check
      _
    $region3: #{cov_parameterized_3d_inertia_matrix_forward.1} parent=1 // pred_check_branch
      %9 = sbr.rel (0) target = $region5
    $region4: #{cov_parameterized_3d_inertia_matrix_forward.1} parent=1 // pred_region
      %s11 = ssub.s32 16, 16
      %12 = vsyncadd [#allocation3], %s11
      %15 = dma.hbm_to_smem %s0, 16, [#allocation2], [#allocation3]
    $region5: #{cov_parameterized_3d_inertia_matrix_forward.1} parent=1 // pred_fallthru
      _
    // Predicated region
    $region6: #{cov_parameterized_3d_inertia_matrix_forward.1} parent=1 // pred_check
      _
    $region7: #{cov_parameterized_3d_inertia_matrix_forward.1} parent=1 // pred_check_branch
      %17 = sbr.rel (0) target = $region9
    $region8: #{cov_parameterized_3d_inertia_matrix_forward.1} parent=1 // pred_region
      %18 = dma.done [#allocation3], 16
    $region9: #{cov_parameterized_3d_inertia_matrix_forward.1} parent=1 // pred_fallthru
      _
    %19 = sfence
    %s20 = sld [smem:[#allocation2]]
    %s21 = sld [smem:[#allocation2 + $0x1]]
    %s22 = sld [smem:[#allocation2 + $0x2]]
    %s23 = sld [smem:[#allocation2 + $0x3]]
    %s24 = sld [smem:[#allocation2 + $0x4]]
    %s25 = sld [smem:[#allocation2 + $0x5]]
    %s26 = smul.f32 %s20, %s20
    %s27 = smul.f32 %s23, %s23
    %s28 = smul.f32 %s21, %s21
    %s29 = sadd.f32 %s27, %s28
    %s30 = smul.f32 %s24, %s24
    %s31 = smul.f32 %s25, %s25
    %s32 = sadd.f32 %s30, %s31
    %s33 = smul.f32 %s22, %s22
    %s34 = sadd.f32 %s32, %s33
    %s35 = smul.f32 %s20, %s23
    %s36 = smul.f32 %s20, %s24
    %s37 = smul.f32 %s23, %s24
    %s38 = smul.f32 %s21, %s25
    %s39 = sadd.f32 %s37, %s38
    %s40 = sadd.f32 %s29, %s34
    %s41 = sadd.f32 %s40, 2e-07
    %s42 = scalar_lea.smem [#allocation5], 0
    %43 = sst [smem:[%s42]] %s41
    %s44 = ssub.f32 0.0, %s35
    %s45 = scalar_lea.smem [#allocation5], 1
    %46 = sst [smem:[%s45]] %s44
    %s47 = ssub.f32 0.0, %s36
    %s48 = scalar_lea.smem [#allocation5], 2
    %49 = sst [smem:[%s48]] %s47
    %s50 = scalar_lea.smem [#allocation5], 3
    %51 = sst [smem:[%s50]] %s44
    %s52 = sadd.f32 %s26, %s34
    %s53 = sadd.f32 %s52, 2e-07
    %s54 = scalar_lea.smem [#allocation5], 4
    %55 = sst [smem:[%s54]] %s53
    %s56 = ssub.f32 0.0, %s39
    %s57 = scalar_lea.smem [#allocation5], 5
    %58 = sst [smem:[%s57]] %s56
    %s59 = scalar_lea.smem [#allocation5], 6
    %60 = sst [smem:[%s59]] %s47
    %s61 = scalar_lea.smem [#allocation5], 7
    %62 = sst [smem:[%s61]] %s56
    %s63 = sadd.f32 %s26, %s29
    %s64 = sadd.f32 %s63, 2e-07
    %s65 = scalar_lea.smem [#allocation5], 8
    %66 = sst [smem:[%s65]] %s64
    // Predicated region
    $region10: #{cov_parameterized_3d_inertia_matrix_forward.1} parent=1 // pred_check
      _
    $region11: #{cov_parameterized_3d_inertia_matrix_forward.1} parent=1 // pred_check_branch
      %68 = sbr.rel (0) target = $region13
    $region12: #{cov_parameterized_3d_inertia_matrix_forward.1} parent=1 // pred_region
      %s70 = ssub.s32 16, 16
      %71 = vsyncadd [#allocation4], %s70
      %s73 = sshll.u32 %s1, 4
      %s74 = int_to_ptr.vmem [resolvable:$true] %s73
      %76 = dma.smem_to_vmem [#allocation5], 16, %s74, [#allocation4]
    $region13: #{cov_parameterized_3d_inertia_matrix_forward.1} parent=1 // pred_fallthru
      _
    // Predicated region
    $region14: #{cov_parameterized_3d_inertia_matrix_forward.1} parent=1 // pred_check
      _
    $region15: #{cov_parameterized_3d_inertia_matrix_forward.1} parent=1 // pred_check_branch
      %78 = sbr.rel (0) target = $region17
    $region16: #{cov_parameterized_3d_inertia_matrix_forward.1} parent=1 // pred_region
      %79 = dma.done [#allocation4], 16
    $region17: #{cov_parameterized_3d_inertia_matrix_forward.1} parent=1 // pred_fallthru
      _
    %80 = sfence
    %81 = vsyncpa [#allocation3], 1
    %82 = vsyncpa [#allocation4], 1

</llo_original>
